<compile_context>
chip_gen: v5e
topology: v5e:2x2
jax: 0.10.0
libtpu: 0.0.40
codegen_flags: <defaults>
</compile_context>

<pallas_src>
import functools

import jax
import jax.numpy as jnp
from jax.experimental import pallas as pl
from jax.experimental.pallas import tpu as pltpu

BN_EPS = 1e-5
NEG_SLOPE = 0.2
LANE = 128


def _round_up(x, m):
    return (x + m - 1) // m * m


def _nnmodel_kernel(x_ref, slab_ref, o_ref, *, in_size, hidden, out_size, vrow):
    """One grid step = one independent forward pass over an [N, in] batch.

    Packed slab layout (all offsets static Python ints):
      rows [0, max(in,hidden)):
        lanes [0, H)         -> w1  [in, H]
        lanes [H, 2H)        -> w2  [H, H]
        lanes [2H, 2H+O)     -> w3  [H, O]
      rows vrow .. vrow+4    -> g1, bt1, g2, bt2, b3 (one per row)
    """
    slab = slab_ref[...]  # tiny ([40,128] f32); value slices below are cheap
    w1 = slab[0:in_size, 0:hidden]
    w2 = slab[0:hidden, hidden:2 * hidden]
    w3 = slab[0:hidden, 2 * hidden:2 * hidden + out_size]
    g1 = slab[vrow + 0:vrow + 1, 0:hidden]
    bt1 = slab[vrow + 1:vrow + 2, 0:hidden]
    g2 = slab[vrow + 2:vrow + 3, 0:hidden]
    bt2 = slab[vrow + 3:vrow + 4, 0:hidden]
    b3 = slab[vrow + 4:vrow + 5, 0:out_size]

    def nn_layer(h, w, gamma, beta):
        # Linear (MXU). Bias omitted: training-mode BN's mean subtraction
        # cancels the Linear bias exactly.
        y = jnp.dot(h, w, preferred_element_type=jnp.float32)
        # BatchNorm1d, training mode (batch stats, biased variance), centered
        # form to avoid catastrophic cancellation.
        mu = jnp.mean(y, axis=0, keepdims=True)
        ym = y - mu
        var = jnp.mean(ym * ym, axis=0, keepdims=True)
        yhat = ym * (gamma * jax.lax.rsqrt(var + BN_EPS)) + beta
        # LeakyReLU (slope in (0,1)) as a single vmax.
        return jnp.maximum(yhat, NEG_SLOPE * yhat)

    x = x_ref[...]
    h1 = nn_layer(x, w1, g1, bt1)
    h2 = nn_layer(h1, w2, g2, bt2)
    o_ref[...] = jnp.dot(h2, w3, preferred_element_type=jnp.float32) + b3


def prepare_params(params):
    """One-time packing of weights + per-layer vectors into one lane-dense
    f32 slab. Call once after init/training, NOT per forward call."""
    w1, w2, w3 = params["w1"], params["w2"], params["w3"]
    in_size, hidden = w1.shape
    out_size = w3.shape[1]
    wrows = max(in_size, hidden)
    vrow = _round_up(wrows, 8)
    rows = _round_up(vrow + 5, 8)
    lanes = _round_up(2 * hidden + out_size, LANE)

    slab = jnp.zeros((rows, lanes), jnp.float32)
    slab = slab.at[:in_size, 0:hidden].set(w1)
    slab = slab.at[:hidden, hidden:2 * hidden].set(w2)
    slab = slab.at[:hidden, 2 * hidden:2 * hidden + out_size].set(w3)
    slab = slab.at[vrow + 0, 0:hidden].set(params["g1"][0])
    slab = slab.at[vrow + 1, 0:hidden].set(params["bt1"][0])
    slab = slab.at[vrow + 2, 0:hidden].set(params["g2"][0])
    slab = slab.at[vrow + 3, 0:hidden].set(params["bt2"][0])
    slab = slab.at[vrow + 4, 0:out_size].set(params["b3"][0])
    return dict(slab=slab, in_size=in_size, hidden=hidden,
                out_size=out_size, vrow=vrow)


def nnmodel_forward_batched(xs, prepared):
    """xs: [G, N, input_size] f32 — G independent forward passes fused into one
    pallas_call (grid over G). Each grid step computes BN statistics over its
    own N rows, exactly matching G separate training-mode module calls."""
    G, N, in_size = xs.shape
    hidden = prepared["hidden"]
    out_size = prepared["out_size"]
    slab = prepared["slab"]
    assert in_size == prepared["in_size"]

    kernel = functools.partial(
        _nnmodel_kernel, in_size=in_size, hidden=hidden,
        out_size=out_size, vrow=prepared["vrow"])

    flops = 2 * G * N * (in_size * hidden + hidden * hidden + hidden * out_size)
    cost = pl.CostEstimate(
        flops=flops,
        transcendentals=2 * G * hidden,  # rsqrt per feature, two BN layers
        bytes_accessed=int(xs.size * 4 + slab.size * 4 + G * N * out_size * 4))

    return pl.pallas_call(
        kernel,
        out_shape=jax.ShapeDtypeStruct((G, N, out_size), jnp.float32),
        grid_spec=pltpu.PrefetchScalarGridSpec(
            num_scalar_prefetch=0,
            grid=(G,),
            in_specs=[
                # Per-batch activation block.
                pl.BlockSpec((None, N, in_size), lambda g: (g, 0, 0)),
                # Packed weight/vector slab: same block index every step ->
                # fetched once, stays VMEM-resident across the grid.
                pl.BlockSpec(slab.shape, lambda g: (0, 0)),
            ],
            out_specs=pl.BlockSpec((None, N, out_size), lambda g: (g, 0, 0)),
        ),
        compiler_params=pltpu.CompilerParams(
            # Independent batches: shard grid across both TensorCores on v7x.
            dimension_semantics=("parallel",)),
        cost_estimate=cost,
    )(xs, slab)


def nnmodel_forward(x, prepared):
    """Single batch [N, input_size]; BN over the whole batch (training mode).
    NOTE: if N grows to thousands, switch to a two-pass BN accumulated over an
    'arbitrary' grid axis instead of keeping the whole batch resident
    (especially on v7x, 64 MiB VMEM)."""
    return nnmodel_forward_batched(x[None], prepared)[0]


def init_params(key, input_size, hidden_size, output_size):
    """nn.Linear-style U(-1/sqrt(fan_in), 1/sqrt(fan_in)) init; BN weight=1,
    bias=0. Weights stored as [in, out] (pre-transposed for the kernel)."""
    ks = jax.random.split(key, 6)

    def linear(kw, kb, fan_in, fan_out):
        bound = 1.0 / jnp.sqrt(fan_in)
        w = jax.random.uniform(kw, (fan_in, fan_out), jnp.float32, -bound, bound)
        b = jax.random.uniform(kb, (1, fan_out), jnp.float32, -bound, bound)
        return w, b

    w1, b1 = linear(ks[0], ks[1], input_size, hidden_size)
    w2, b2 = linear(ks[2], ks[3], hidden_size, hidden_size)
    w3, b3 = linear(ks[4], ks[5], hidden_size, output_size)
    return dict(
        w1=w1, b1=b1, g1=jnp.ones((1, hidden_size), jnp.float32),
        bt1=jnp.zeros((1, hidden_size), jnp.float32),
        w2=w2, b2=b2, g2=jnp.ones((1, hidden_size), jnp.float32),
        bt2=jnp.zeros((1, hidden_size), jnp.float32),
        w3=w3, b3=b3,
    )


def reference_forward(x, p):
    """Pure-JAX reference matching PyTorch training-mode semantics exactly
    (including the Linear biases b1/b2, which BN cancels)."""
    def layer(h, w, b, g, bt):
        y = h @ w + b
        mu = y.mean(axis=0, keepdims=True)
        var = ((y - mu) ** 2).mean(axis=0, keepdims=True)
        yhat = (y - mu) / jnp.sqrt(var + BN_EPS) * g + bt
        return jnp.where(yhat >= 0, yhat, NEG_SLOPE * yhat)

    h1 = layer(x, p["w1"], p["b1"], p["g1"], p["bt1"])
    h2 = layer(h1, p["w2"], p["b2"], p["g2"], p["bt2"])
    return h2 @ p["w3"] + p["b3"]


if __name__ == "__main__":
    G, N, INPUT, HIDDEN, OUTPUT = 4, 8, 32, 32, 16

    key = jax.random.PRNGKey(0)
    k_x, k_p = jax.random.split(key)
    xs = jax.random.normal(k_x, (G, N, INPUT), jnp.float32)
    params = init_params(k_p, INPUT, HIDDEN, OUTPUT)
    prepared = prepare_params(params)   # one-time packing, outside forward path

    # Batched path: G independent forwards fused in one pallas_call.
    out = jax.block_until_ready(nnmodel_forward_batched(xs, prepared))
    ref = jax.vmap(lambda xb: reference_forward(xb, params))(xs)
    assert out.shape == (G, N, OUTPUT)
    assert jnp.allclose(out, ref, atol=1e-4, rtol=1e-4), "batched mismatch vs reference"

    # Single-batch path (original module semantics).
    out1 = jax.block_until_ready(nnmodel_forward(xs[0], prepared))
    assert out1.shape == (N, OUTPUT)
    assert jnp.allclose(out1, ref[0], atol=1e-4, rtol=1e-4), "single-batch mismatch"

    print("KERNEL_OK")
</pallas_src>

<mosaic_0001>
module attributes {stable_mosaic.version = 11 : i64} {
  func.func @_nnmodel_kernel(%arg0: i32, %arg1: memref<1x8x32xf32, #tpu.memory_space<vmem>>, %arg2: memref<40x128xf32, #tpu.memory_space<vmem>>, %arg3: memref<1x8x16xf32, #tpu.memory_space<vmem>>) attributes {dimension_semantics = [#tpu.dimension_semantics<parallel>], iteration_bounds = array<i64: 4>, scalar_prefetch = 0 : i64, scratch_operands = 0 : i64, tpu.core_type = #tpu.core_type<tc>, window_params = [{transform_indices = @transform_0, window_bounds = array<i64: 1, 8, 32>}, {pipeline_mode = #tpu.pipeline_mode<synchronous>, transform_indices = @transform_1, window_bounds = array<i64: 40, 128>}, {transform_indices = @transform_2, window_bounds = array<i64: 1, 8, 16>}]} {
    %c0 = arith.constant 0 : index
    %c0_0 = arith.constant 0 : index
    %0 = vector.load %arg2[%c0, %c0_0] : memref<40x128xf32, #tpu.memory_space<vmem>>, vector<40x128xf32>
    %1 = vector.extract_strided_slice %0 {offsets = [0, 0], sizes = [32, 32], strides = [1, 1]} : vector<40x128xf32> to vector<32x32xf32>
    %2 = vector.extract_strided_slice %0 {offsets = [0, 32], sizes = [32, 32], strides = [1, 1]} : vector<40x128xf32> to vector<32x32xf32>
    %3 = vector.extract_strided_slice %0 {offsets = [0, 64], sizes = [32, 16], strides = [1, 1]} : vector<40x128xf32> to vector<32x16xf32>
    %4 = vector.extract_strided_slice %0 {offsets = [32, 0], sizes = [1, 32], strides = [1, 1]} : vector<40x128xf32> to vector<1x32xf32>
    %5 = vector.extract_strided_slice %0 {offsets = [33, 0], sizes = [1, 32], strides = [1, 1]} : vector<40x128xf32> to vector<1x32xf32>
    %6 = vector.extract_strided_slice %0 {offsets = [34, 0], sizes = [1, 32], strides = [1, 1]} : vector<40x128xf32> to vector<1x32xf32>
    %7 = vector.extract_strided_slice %0 {offsets = [35, 0], sizes = [1, 32], strides = [1, 1]} : vector<40x128xf32> to vector<1x32xf32>
    %8 = vector.extract_strided_slice %0 {offsets = [36, 0], sizes = [1, 16], strides = [1, 1]} : vector<40x128xf32> to vector<1x16xf32>
    %c0_1 = arith.constant 0 : index
    %c0_2 = arith.constant 0 : index
    %c0_3 = arith.constant 0 : index
    %9 = vector.load %arg1[%c0_1, %c0_2, %c0_3] : memref<1x8x32xf32, #tpu.memory_space<vmem>>, vector<1x8x32xf32>
    %10 = vector.shape_cast %9 : vector<1x8x32xf32> to vector<8x32xf32>
    %cst = arith.constant dense<0.000000e+00> : vector<8x32xf32>
    %11 = tpu.matmul %10, %1, %cst {dimension_numbers = #tpu.dot_dimension_numbers<[1], [0], [0], [1], [0, 0, 1, 1], [], []>} : vector<8x32xf32>, vector<32x32xf32>, vector<8x32xf32> -> vector<8x32xf32>
    %cst_4 = arith.constant dense<0.000000e+00> : vector<32xf32>
    %12 = vector.multi_reduction <add>, %11, %cst_4 [0] : vector<8x32xf32> to vector<32xf32>
    %13 = vector.shape_cast %12 : vector<32xf32> to vector<1x32xf32>
    %cst_5 = arith.constant 8.000000e+00 : f32
    %14 = vector.broadcast %cst_5 : f32 to vector<1x32xf32>
    %15 = arith.divf %13, %14 : vector<1x32xf32>
    %16 = vector.broadcast %15 : vector<1x32xf32> to vector<8x32xf32>
    %17 = arith.subf %11, %16 : vector<8x32xf32>
    %18 = arith.mulf %17, %17 : vector<8x32xf32>
    %cst_6 = arith.constant dense<0.000000e+00> : vector<32xf32>
    %19 = vector.multi_reduction <add>, %18, %cst_6 [0] : vector<8x32xf32> to vector<32xf32>
    %20 = vector.shape_cast %19 : vector<32xf32> to vector<1x32xf32>
    %cst_7 = arith.constant 8.000000e+00 : f32
    %21 = vector.broadcast %cst_7 : f32 to vector<1x32xf32>
    %22 = arith.divf %20, %21 : vector<1x32xf32>
    %cst_8 = arith.constant 9.99999974E-6 : f32
    %23 = vector.broadcast %cst_8 : f32 to vector<1x32xf32>
    %24 = arith.addf %22, %23 : vector<1x32xf32>
    %25 = math.rsqrt %24 : vector<1x32xf32>
    %26 = arith.mulf %4, %25 : vector<1x32xf32>
    %27 = vector.broadcast %26 : vector<1x32xf32> to vector<8x32xf32>
    %28 = arith.mulf %17, %27 : vector<8x32xf32>
    %29 = vector.broadcast %5 : vector<1x32xf32> to vector<8x32xf32>
    %30 = arith.addf %28, %29 : vector<8x32xf32>
    %cst_9 = arith.constant 2.000000e-01 : f32
    %31 = vector.broadcast %cst_9 : f32 to vector<8x32xf32>
    %32 = arith.mulf %31, %30 : vector<8x32xf32>
    %33 = arith.maximumf %30, %32 : vector<8x32xf32>
    %cst_10 = arith.constant dense<0.000000e+00> : vector<8x32xf32>
    %34 = tpu.matmul %33, %2, %cst_10 {dimension_numbers = #tpu.dot_dimension_numbers<[1], [0], [0], [1], [0, 0, 1, 1], [], []>} : vector<8x32xf32>, vector<32x32xf32>, vector<8x32xf32> -> vector<8x32xf32>
    %cst_11 = arith.constant dense<0.000000e+00> : vector<32xf32>
    %35 = vector.multi_reduction <add>, %34, %cst_11 [0] : vector<8x32xf32> to vector<32xf32>
    %36 = vector.shape_cast %35 : vector<32xf32> to vector<1x32xf32>
    %cst_12 = arith.constant 8.000000e+00 : f32
    %37 = vector.broadcast %cst_12 : f32 to vector<1x32xf32>
    %38 = arith.divf %36, %37 : vector<1x32xf32>
    %39 = vector.broadcast %38 : vector<1x32xf32> to vector<8x32xf32>
    %40 = arith.subf %34, %39 : vector<8x32xf32>
    %41 = arith.mulf %40, %40 : vector<8x32xf32>
    %cst_13 = arith.constant dense<0.000000e+00> : vector<32xf32>
    %42 = vector.multi_reduction <add>, %41, %cst_13 [0] : vector<8x32xf32> to vector<32xf32>
    %43 = vector.shape_cast %42 : vector<32xf32> to vector<1x32xf32>
    %cst_14 = arith.constant 8.000000e+00 : f32
    %44 = vector.broadcast %cst_14 : f32 to vector<1x32xf32>
    %45 = arith.divf %43, %44 : vector<1x32xf32>
    %cst_15 = arith.constant 9.99999974E-6 : f32
    %46 = vector.broadcast %cst_15 : f32 to vector<1x32xf32>
    %47 = arith.addf %45, %46 : vector<1x32xf32>
    %48 = math.rsqrt %47 : vector<1x32xf32>
    %49 = arith.mulf %6, %48 : vector<1x32xf32>
    %50 = vector.broadcast %49 : vector<1x32xf32> to vector<8x32xf32>
    %51 = arith.mulf %40, %50 : vector<8x32xf32>
    %52 = vector.broadcast %7 : vector<1x32xf32> to vector<8x32xf32>
    %53 = arith.addf %51, %52 : vector<8x32xf32>
    %cst_16 = arith.constant 2.000000e-01 : f32
    %54 = vector.broadcast %cst_16 : f32 to vector<8x32xf32>
    %55 = arith.mulf %54, %53 : vector<8x32xf32>
    %56 = arith.maximumf %53, %55 : vector<8x32xf32>
    %cst_17 = arith.constant dense<0.000000e+00> : vector<8x16xf32>
    %57 = tpu.matmul %56, %3, %cst_17 {dimension_numbers = #tpu.dot_dimension_numbers<[1], [0], [0], [1], [0, 0, 1, 1], [], []>} : vector<8x32xf32>, vector<32x16xf32>, vector<8x16xf32> -> vector<8x16xf32>
    %58 = vector.broadcast %8 : vector<1x16xf32> to vector<8x16xf32>
    %59 = arith.addf %57, %58 : vector<8x16xf32>
    %c0_18 = arith.constant 0 : index
    %c0_19 = arith.constant 0 : index
    %c0_20 = arith.constant 0 : index
    %60 = vector.load %arg3[%c0_18, %c0_19, %c0_20] : memref<1x8x16xf32, #tpu.memory_space<vmem>>, vector<1x8x16xf32>
    %61 = vector.shape_cast %60 : vector<1x8x16xf32> to vector<8x16xf32>
    %62 = vector.shape_cast %59 : vector<8x16xf32> to vector<1x8x16xf32>
    tpu.vector_store %arg3[%c0_18, %c0_19, %c0_20], %62 {strides = array<i32>} : memref<1x8x16xf32, #tpu.memory_space<vmem>>, vector<1x8x16xf32>,
    return
  }
  func.func @transform_0(%arg0: i32) -> (i32, i32, i32) {
    %c0_i32 = arith.constant 0 : i32
    %c0_i32_0 = arith.constant 0 : i32
    %c0_i32_1 = arith.constant 0 : i32
    return %arg0, %c0_i32, %c0_i32_0 : i32, i32, i32
  }
  func.func @transform_1(%arg0: i32) -> (i32, i32) {
    %c0_i32 = arith.constant 0 : i32
    %c0_i32_0 = arith.constant 0 : i32
    %c0_i32_1 = arith.constant 0 : i32
    return %c0_i32, %c0_i32_0 : i32, i32
  }
  func.func @transform_2(%arg0: i32) -> (i32, i32, i32) {
    %c0_i32 = arith.constant 0 : i32
    %c0_i32_0 = arith.constant 0 : i32
    %c0_i32_1 = arith.constant 0 : i32
    return %arg0, %c0_i32, %c0_i32_0 : i32, i32, i32
  }
}

</mosaic_0001>

<llo_original>
// kernel: tpu_custom_call.1
$region0: #{tpu_custom_call.1}
  #allocation0 [shape = 'u32[]', space=smem, size = 0x4, offset = 0x4, fixed_abs, tag = 'smem constant byte address 0x4 - core index']
  #allocation1 [shape = 'u32[72,128]{1,0:T(1,128)}', space=vmem, size = 0x9000, scoped, tag = 'internal scratch']
  %s0 = inlined_call_operand.hbm [shape: f32[4,8,32], index: 0, kind: input, shape index: {}]
  %s1 = inlined_call_operand.hbm [shape: f32[40,128], index: 1, kind: input, shape index: {}]
  %s2 = inlined_call_operand.hbm [shape: f32[4,8,16], index: 2, kind: output, shape index: {}]
  %s3 = sld [smem:[#allocation0]]
  $region49: #{tpu_custom_call.1} parent=0
    _
  %s5 = ssub.s32 1, %s3
  %s6 = scalar_select 0, %s5, %s3
  $region1: #{tpu_custom_call.1} parent=0
    #allocation2 [shape = 'u8[8192]{0}', space=vmem, size = 0x2000, scoped, tag = 'input window, operand 0']
    #allocation3 [shape = 's32[2]{0}', space=sflag, size = 0x8, scoped, tag = 'scoped memory for tpu_custom_call.1']
    #allocation4 [shape = 's32[2]{0}', space=sflag, size = 0x8, scoped, tag = 'scoped memory for tpu_custom_call.1']
    #allocation5 [shape = 'u8[20480]{0}', space=vmem, size = 0x5000, scoped, tag = 'input window, operand 1, single buffered']
    #allocation6 [shape = 's32[1]{0}', space=sflag, size = 0x4, scoped, tag = 'scoped memory for tpu_custom_call.1']
    #allocation7 [shape = 'u8[8192]{0}', space=vmem, size = 0x2000, scoped, tag = 'output window, operand 0']
    %7 = vsyncpa [#allocation3], 0
    %s8 = scalar_lea.sflag [#allocation3], 1
    %9 = vsyncpa %s8, 0
    %10 = vsyncpa [#allocation6], 0
    %11 = vsyncpa [#allocation4], 0
    %s12 = scalar_lea.sflag [#allocation4], 1
    %13 = vsyncpa %s12, 0
    loop: start=0, step=1, limit=6
    $region2: #{tpu_custom_call.1} parent=1 // loop_pre_header
      _
    $region3: #{tpu_custom_call.1} parent=1 // loop_header
      %s15 = sphi 0, %s19
      %p16 = scmp.ge.s32.totalorder %s15, 6
      %s25 = sphi 0, %s27
      %s28 = sphi 0, %s25
      %s29 = sphi 0, %s28
      %s45 = sphi 0, %s29
      %s49 = sphi 0, %s49
      %s51 = sphi 0, %s49
      %s52 = sphi 0, %s51
      %s66 = sphi 0, %s52
      %s72 = sphi 0, %s74
      %s75 = sphi 0, %s72
      %s76 = sphi 0, %s75
      %s92 = sphi 0, %s76
    $region4: #{tpu_custom_call.1} parent=1 // loop_header_branch
      %18 = sbr.rel (%p16) target = $region8
    $region5: #{tpu_custom_call.1} parent=1 // loop_body
      %s20 = ssub.s32 %s15, 1
      %s21 = ssub.s32 %s15, 2
      %s22 = sadd.s32 %s15, 1
      %s23 = ssub.s32 %s15, %s22
      %p24 = scmp.eq.s32.totalorder %s23, 0
      %s26 = sadd.s32 %s25, 1
      %s27 = scalar_select %p24, %s25, %s26
      %p30 = pneg %p24
      %p31 = scmp.eq.s32.totalorder %s15, 3
      %p32 = por %p30, %p31
      %p33 = scmp.ne.s32.totalorder %s25, %s28
      %p34 = scmp.eq.s32.totalorder %s15, 0
      %p35 = por %p33, %p34
      %p36 = scmp.ne.s32.totalorder %s25, %s28
      %p37 = scmp.eq.s32.totalorder %s20, 3
      %p38 = por %p36, %p37
      %p39 = scmp.ne.s32.totalorder %s28, %s29
      %p40 = scmp.eq.s32.totalorder %s20, 0
      %p41 = por %p39, %p40
      %p42 = scmp.ne.s32.totalorder %s28, %s29
      %p43 = scmp.eq.s32.totalorder %s21, 3
      %p44 = por %p42, %p43
      %p46 = scmp.ne.s32.totalorder %s29, %s45
      %p47 = scmp.eq.s32.totalorder %s21, 0
      %p48 = por %p46, %p47
      %s50 = sadd.s32 %s49, 1
      %p53 = scmp.eq.s32.totalorder %s15, 3
      %p54 = scmp.ne.s32.totalorder %s49, %s51
      %p55 = scmp.eq.s32.totalorder %s15, 0
      %p56 = por %p54, %p55
      %p57 = scmp.ne.s32.totalorder %s49, %s51
      %p58 = scmp.eq.s32.totalorder %s20, 3
      %p59 = por %p57, %p58
      %p60 = scmp.ne.s32.totalorder %s51, %s52
      %p61 = scmp.eq.s32.totalorder %s20, 0
      %p62 = por %p60, %p61
      %p63 = scmp.ne.s32.totalorder %s51, %s52
      %p64 = scmp.eq.s32.totalorder %s21, 3
      %p65 = por %p63, %p64
      %p67 = scmp.ne.s32.totalorder %s52, %s66
      %p68 = scmp.eq.s32.totalorder %s21, 0
      %p69 = por %p67, %p68
      %s70 = ssub.s32 %s15, %s22
      %p71 = scmp.eq.s32.totalorder %s70, 0
      %s73 = sadd.s32 %s72, 1
      %s74 = scalar_select %p71, %s72, %s73
      %p77 = pneg %p71
      %p78 = scmp.eq.s32.totalorder %s15, 3
      %p79 = por %p77, %p78
      %p80 = scmp.ne.s32.totalorder %s72, %s75
      %p81 = scmp.eq.s32.totalorder %s15, 0
      %p82 = por %p80, %p81
      %p83 = scmp.ne.s32.totalorder %s72, %s75
      %p84 = scmp.eq.s32.totalorder %s20, 3
      %p85 = por %p83, %p84
      %p86 = scmp.ne.s32.totalorder %s75, %s76
      %p87 = scmp.eq.s32.totalorder %s20, 0
      %p88 = por %p86, %p87
      %p89 = scmp.ne.s32.totalorder %s75, %s76
      %p90 = scmp.eq.s32.totalorder %s21, 3
      %p91 = por %p89, %p90
      %p93 = scmp.ne.s32.totalorder %s76, %s92
      %p94 = scmp.eq.s32.totalorder %s21, 0
      %p95 = por %p93, %p94
      %p96 = scmp.le.s32.totalorder 1, %s15
      %p97 = scmp.lt.s32.totalorder %s15, 5
      %p98 = pnand %p96, %p97
      %p99 = pneg %p98
      // Predicated region
      $region9: #{tpu_custom_call.1} parent=5 // pred_check
        _
      $region10: #{tpu_custom_call.1} parent=5 // pred_check_branch
        %101 = sbr.rel (%p98) target = $region12
      $region11: #{tpu_custom_call.1} parent=5 // pred_region
        %s102 = ssub.s32 %s15, 1
        // Predicated region
        $region13: #{tpu_custom_call.1} parent=11 // pred_check
          %p103 = pneg %p62
        $region14: #{tpu_custom_call.1} parent=11 // pred_check_branch
          %105 = sbr.rel (%p103) target = $region16
        $region15: #{tpu_custom_call.1} parent=11 // pred_region
          %107 = vsyncadd [#allocation6], 0
          %s108 = sshll.u32 %s1, 4
          %s109 = int_to_ptr.hbm [resolvable:$true] %s108
          %s110 = sshll.u32 [#allocation5], 4
          %s111 = int_to_ptr.vmem [resolvable:$true] %s110
          %116 = dma.hbm_to_vmem [thread:$0]  %s109, 640, %s111, [#allocation6], 128, 128, 8
        $region16: #{tpu_custom_call.1} parent=11 // pred_fallthru
          _
      $region12: #{tpu_custom_call.1} parent=5 // pred_fallthru
        _
      %p117 = scmp.lt.s32.totalorder %s15, 4
      // Predicated region
      $region17: #{tpu_custom_call.1} parent=5 // pred_check
        %p118 = pneg %p117
      $region18: #{tpu_custom_call.1} parent=5 // pred_check_branch
        %120 = sbr.rel (%p118) target = $region20
      $region19: #{tpu_custom_call.1} parent=5 // pred_region
        // Predicated region
        $region21: #{tpu_custom_call.1} parent=19 // pred_check
          %p121 = pneg %p35
        $region22: #{tpu_custom_call.1} parent=19 // pred_check_branch
          %123 = sbr.rel (%p121) target = $region24
        $region23: #{tpu_custom_call.1} parent=19 // pred_region
          %s124 = sand.u32 %s25, 1
          %s125 = scalar_lea.sflag [#allocation3], %s124
          %s126 = sand.u32 %s25, 1
          %s127 = smul.addr %s126, 8
          %s128 = scalar_lea.vmem [#allocation2], %s127
          %130 = vsyncadd %s125, 0
          %s131 = smul.addr %s15, 8
          %s132 = scalar_lea.hbm %s0, %s131
          %s134 = sshll.u32 %s132, 4
          %s135 = int_to_ptr.hbm [resolvable:$true] %s134
          %s136 = sshll.u32 %s128, 4
          %s137 = int_to_ptr.vmem [resolvable:$true] %s136
          %139 = dma.hbm_to_vmem [thread:$0]  %s135, 128, %s137, %s125
        $region24: #{tpu_custom_call.1} parent=19 // pred_fallthru
          _
      $region20: #{tpu_custom_call.1} parent=5 // pred_fallthru
        _
      %p140 = scmp.le.s32.totalorder 1, %s15
      %p141 = scmp.lt.s32.totalorder %s15, 5
      %p142 = pnand %p140, %p141
      %p143 = pneg %p142
      // Predicated region
      $region25: #{tpu_custom_call.1} parent=5 // pred_check
        _
      $region26: #{tpu_custom_call.1} parent=5 // pred_check_branch
        %145 = sbr.rel (%p142) target = $region28
      $region27: #{tpu_custom_call.1} parent=5 // pred_region
        %s146 = ssub.s32 %s15, 1
        %s147 = sand.u32 %s28, 1
        %s148 = scalar_lea.sflag [#allocation3], %s147
        %s149 = sand.u32 %s28, 1
        %s150 = smul.addr %s149, 8
        %s151 = scalar_lea.vmem [#allocation2], %s150
        // Predicated region
        $region29: #{tpu_custom_call.1} parent=27 // pred_check
          %p152 = pneg %p41
        $region30: #{tpu_custom_call.1} parent=27 // pred_check_branch
          %154 = sbr.rel (%p152) target = $region32
        $region31: #{tpu_custom_call.1} parent=27 // pred_region
          %156 = dma.done %s148, 128
        $region32: #{tpu_custom_call.1} parent=27 // pred_fallthru
          _
        // Predicated region
        $region33: #{tpu_custom_call.1} parent=27 // pred_check
          %p157 = pneg %p62
        $region34: #{tpu_custom_call.1} parent=27 // pred_check_branch
          %159 = sbr.rel (%p157) target = $region36
        $region35: #{tpu_custom_call.1} parent=27 // pred_region
          %161 = dma.done [#allocation6], 640
        $region36: #{tpu_custom_call.1} parent=27 // pred_fallthru
          _
        %s162 = sand.u32 %s28, 1
        %s163 = scalar_lea.sflag [#allocation3], %s162
        %s164 = sand.u32 %s28, 1
        %s165 = smul.addr %s164, 8
        %s166 = scalar_lea.vmem [#allocation2], %s165
        %p167 = pneg %p41
        %p168 = pneg %p38
        %p169 = pneg %p62
        %p170 = pneg %p59
        %p171 = pneg %p88
        %p172 = pneg %p85
        %s173 = sand.u32 %s75, 1
        %s174 = scalar_lea.sflag [#allocation4], %s173
        %s175 = sand.u32 %s75, 1
        %s176 = smul.addr %s175, 8
        %s177 = scalar_lea.vmem [#allocation7], %s176
        %v178 = vld [vmem:[#allocation5] sm:$0xff]
        %v179 = vld [vmem:[#allocation5 + $0x8] sm:$0xff]
        %v180 = vld [vmem:[#allocation5 + $0x10] sm:$0xff]
        %v181 = vld [vmem:[#allocation5 + $0x18] sm:$0xff]
        %v182 = vld [vmem:[#allocation5 + $0x20] sm:$0xff]
        %v183 = vld [vmem:[%s151] sm:$0xff]
        %vm184 = vcmask 261120
        %v186 = vsel %vm184, %v183, 0
        %188 = vmatpush.msra.mxu0 0.0
        %189 = vmatpush.msra.mxu0 0.0
        %190 = vmatpush.msra.mxu0 0.0
        %191 = vmatpush.msra.mxu0 0.0
        %192 = vmatpush.msra.mxu0 0.0
        %193 = vmatpush.msra.mxu0 0.0
        %194 = vmatpush.msra.mxu0 0.0
        %195 = vmatpush.msra.mxu0 0.0
        %196 = vmatpush.msra.mxu0 0.0
        %197 = vmatpush.msra.mxu0 0.0
        %198 = vmatpush.msra.mxu0 0.0
        %199 = vmatpush.msra.mxu0 0.0
        %200 = vmatpush.msra.mxu0 %v181
        %201 = vmatpush.msra.mxu0 %v180
        %202 = vmatpush.msra.mxu0 %v179
        %203 = vmatpush.msra.mxu0 %v178
        %204 = vmatmul.f32.gmra.mxu0 %v186
        %v205 = vpop.f32.mrf.mxu0
        %v206 = vadd.f32 0.0, %v205
        %207 = vdwg.mxu0
        %v208 = vsel %vm184, %v206, 0.0
        %v209 = vrot.slane %v208, 4
        %v210 = vadd.f32 %v208, %v209
        %v211 = vrot.slane %v210, 2
        %v212 = vadd.f32 %v210, %v211
        %v213 = vrot.slane %v212, 1
        %v214 = vadd.f32 %v212, %v213
        %v215 = vrcp.pop 8.0
        %v216 = vmul.f32 8.0, %v215
        %v217 = vsub.f32 1.0, %v216
        %v218 = vmul.f32 %v215, %v217
        %v219 = vadd.f32 %v215, %v218
        %vm220 = vweird.f32 %v215
        %v221 = vsel %vm220, %v215, %v219
        %v222 = vmul.f32 %v214, %v221
        %v223 = vsub.f32 %v206, %v222
        %v224 = vmul.f32 %v223, %v223
        %v225 = vsel %vm184, %v224, 0.0
        %v226 = vrot.slane %v225, 4
        %v227 = vadd.f32 %v225, %v226
        %v228 = vrot.slane %v227, 2
        %v229 = vadd.f32 %v227, %v228
        %v230 = vrot.slane %v229, 1
        %v231 = vadd.f32 %v229, %v230
        %v232 = vmul.f32 %v231, %v221
        %v233 = vadd.f32 %v232, 1e-05
        %v234 = vrsqrt.pop %v233
        %v235 = vmul.f32 %v234, %v233
        %v236 = vmul.f32 %v235, %v234
        %v237 = vmul.f32 0.5, %v236
        %v238 = vsub.f32 1.5, %v237
        %v239 = vmul.f32 %v234, %v238
        %vm240 = vweird.f32 %v233
        %vm241 = vweird.f32 %v234
        %vm242 = vmor %vm240, %vm241
        %v243 = vsel %vm242, %v234, %v239
        %v244 = vmul.f32 %v182, %v243
        %v245 = vperm.slane %v244, 0
        %v246 = vmul.f32 %v223, %v245
        %v247 = vperm.slane %v182, 1
        %v248 = vadd.f32 %v246, %v247
        %v249 = vmul.f32 %v248, 0.2
        %v250 = vmax.f32 %v248, %v249
        %255 = vrot.lane.b32.xlu0 %v178, 96
        %v256 = vpop.permute.xlu0 %255
        %257 = vrot.lane.b32.xlu0 %v179, 96
        %v258 = vpop.permute.xlu0 %257
        %259 = vrot.lane.b32.xlu0 %v180, 96
        %v260 = vpop.permute.xlu0 %259
        %261 = vrot.lane.b32.xlu0 %v181, 96
        %v262 = vpop.permute.xlu0 %261
        %v268 = vsel %vm184, %v250, 0
        %270 = vmatpush.msra.mxu0 0.0
        %271 = vmatpush.msra.mxu0 0.0
        %272 = vmatpush.msra.mxu0 0.0
        %273 = vmatpush.msra.mxu0 0.0
        %274 = vmatpush.msra.mxu0 0.0
        %275 = vmatpush.msra.mxu0 0.0
        %276 = vmatpush.msra.mxu0 0.0
        %277 = vmatpush.msra.mxu0 0.0
        %278 = vmatpush.msra.mxu0 0.0
        %279 = vmatpush.msra.mxu0 0.0
        %280 = vmatpush.msra.mxu0 0.0
        %281 = vmatpush.msra.mxu0 0.0
        %282 = vmatpush.msra.mxu0 %v262
        %283 = vmatpush.msra.mxu0 %v260
        %284 = vmatpush.msra.mxu0 %v258
        %285 = vmatpush.msra.mxu0 %v256
        %286 = vmatmul.f32.gmra.mxu0 %v268
        %v287 = vpop.f32.mrf.mxu0
        %v288 = vadd.f32 0.0, %v287
        %289 = vdwg.mxu0
        %v290 = vsel %vm184, %v288, 0.0
        %v291 = vrot.slane %v290, 4
        %v292 = vadd.f32 %v290, %v291
        %v293 = vrot.slane %v292, 2
        %v294 = vadd.f32 %v292, %v293
        %v295 = vrot.slane %v294, 1
        %v296 = vadd.f32 %v294, %v295
        %v297 = vmul.f32 %v296, %v221
        %v298 = vsub.f32 %v288, %v297
        %v299 = vmul.f32 %v298, %v298
        %v300 = vsel %vm184, %v299, 0.0
        %v301 = vrot.slane %v300, 4
        %v302 = vadd.f32 %v300, %v301
        %v303 = vrot.slane %v302, 2
        %v304 = vadd.f32 %v302, %v303
        %v305 = vrot.slane %v304, 1
        %v306 = vadd.f32 %v304, %v305
        %v307 = vmul.f32 %v306, %v221
        %v308 = vadd.f32 %v307, 1e-05
        %v309 = vrsqrt.pop %v308
        %v310 = vmul.f32 %v309, %v308
        %v311 = vmul.f32 %v310, %v309
        %v312 = vmul.f32 0.5, %v311
        %v313 = vsub.f32 1.5, %v312
        %v314 = vmul.f32 %v309, %v313
        %vm315 = vweird.f32 %v308
        %vm316 = vweird.f32 %v309
        %vm317 = vmor %vm315, %vm316
        %v318 = vsel %vm317, %v309, %v314
        %v319 = vmul.f32 %v182, %v318
        %v320 = vperm.slane %v319, 2
        %v321 = vmul.f32 %v298, %v320
        %v322 = vperm.slane %v182, 3
        %v323 = vadd.f32 %v321, %v322
        %v324 = vmul.f32 %v323, 0.2
        %v325 = vmax.f32 %v323, %v324
        %v326 = vperm.slane %v182, 4
        %327 = vrot.lane.b32.xlu0 %v178, 64
        %v328 = vpop.permute.xlu0 %327
        %329 = vrot.lane.b32.xlu0 %v179, 64
        %v330 = vpop.permute.xlu0 %329
        %331 = vrot.lane.b32.xlu0 %v180, 64
        %v332 = vpop.permute.xlu0 %331
        %333 = vrot.lane.b32.xlu0 %v181, 64
        %v334 = vpop.permute.xlu0 %333
        %v340 = vsel %vm184, %v325, 0
        %342 = vmatpush.msra.mxu0 0.0
        %343 = vmatpush.msra.mxu0 0.0
        %344 = vmatpush.msra.mxu0 0.0
        %345 = vmatpush.msra.mxu0 0.0
        %346 = vmatpush.msra.mxu0 0.0
        %347 = vmatpush.msra.mxu0 0.0
        %348 = vmatpush.msra.mxu0 0.0
        %349 = vmatpush.msra.mxu0 0.0
        %350 = vmatpush.msra.mxu0 0.0
        %351 = vmatpush.msra.mxu0 0.0
        %352 = vmatpush.msra.mxu0 0.0
        %353 = vmatpush.msra.mxu0 0.0
        %354 = vmatpush.msra.mxu0 %v334
        %355 = vmatpush.msra.mxu0 %v332
        %356 = vmatpush.msra.mxu0 %v330
        %357 = vmatpush.msra.mxu0 %v328
        %358 = vmatmul.f32.gmra.mxu0 %v340
        %v359 = vpop.f32.mrf.mxu0
        %v360 = vadd.f32 %v326, %v359
        %361 = vdwg.mxu0
        %vm362 = vcmask 130048
        %363 = vst.msk [vmem:[%s177] sm:$0xff] %vm362, %v360
        %s364 = sand.u32 %s75, 1
        %s365 = scalar_lea.sflag [#allocation4], %s364
        %s366 = sand.u32 %s75, 1
        %s367 = smul.addr %s366, 8
        %s368 = scalar_lea.vmem [#allocation7], %s367
        // Predicated region
        $region37: #{tpu_custom_call.1} parent=27 // pred_check
          %p369 = pneg %p85
        $region38: #{tpu_custom_call.1} parent=27 // pred_check_branch
          %371 = sbr.rel (%p369) target = $region40
        $region39: #{tpu_custom_call.1} parent=27 // pred_region
          %373 = vsyncadd %s365, 0
          %s374 = smul.addr %s20, 8
          %s375 = scalar_lea.hbm %s2, %s374
          %s377 = sshll.u32 %s368, 4
          %s378 = int_to_ptr.vmem [resolvable:$true] %s377
          %s379 = sshll.u32 %s375, 4
          %s380 = int_to_ptr.hbm [resolvable:$true] %s379
          %382 = dma.vmem_to_hbm [thread:$0]  %s378, 128, %s380, %s365
        $region40: #{tpu_custom_call.1} parent=27 // pred_fallthru
          _
      $region28: #{tpu_custom_call.1} parent=5 // pred_fallthru
        _
      %p383 = scmp.le.s32.totalorder 2, %s15
      // Predicated region
      $region41: #{tpu_custom_call.1} parent=5 // pred_check
        %p384 = pneg %p383
      $region42: #{tpu_custom_call.1} parent=5 // pred_check_branch
        %386 = sbr.rel (%p384) target = $region44
      $region43: #{tpu_custom_call.1} parent=5 // pred_region
        %s387 = ssub.s32 %s15, 2
        // Predicated region
        $region45: #{tpu_custom_call.1} parent=43 // pred_check
          %p388 = pneg %p91
        $region46: #{tpu_custom_call.1} parent=43 // pred_check_branch
          %390 = sbr.rel (%p388) target = $region48
        $region47: #{tpu_custom_call.1} parent=43 // pred_region
          %s391 = sand.u32 %s76, 1
          %s392 = scalar_lea.sflag [#allocation4], %s391
          %s393 = sand.u32 %s76, 1
          %s394 = smul.addr %s393, 8
          %s395 = scalar_lea.vmem [#allocation7], %s394
          %397 = dma.done %s392, 128
        $region48: #{tpu_custom_call.1} parent=43 // pred_fallthru
          _
      $region44: #{tpu_custom_call.1} parent=5 // pred_fallthru
        _
    $region6: #{tpu_custom_call.1} parent=1 // loop_footer
      %s19 = sadd.s32 1, %s15
    $region7: #{tpu_custom_call.1} parent=1 // loop_footer_branch
      %14 = sbr.rel target = $region3
    $region8: #{tpu_custom_call.1} parent=1 // loop_exit
      _
    %398 = vsyncpa [#allocation3], 1
    %s399 = scalar_lea.sflag [#allocation3], 1
    %400 = vsyncpa %s399, 1
    %401 = vsyncpa [#allocation6], 1
    %402 = vsyncpa [#allocation4], 1
    %s403 = scalar_lea.sflag [#allocation4], 1
    %404 = vsyncpa %s403, 1

</llo_original>
